<compile_context>
chip_gen: v7x
topology: tpu7x:2x2x1
jax: 0.10.0
libtpu: 0.0.40
codegen_flags: <defaults>
</compile_context>

<pallas_src>
import functools

import jax
import jax.numpy as jnp
from jax.experimental import pallas as pl
from jax.experimental.pallas import tpu as pltpu

LN_EPS = 1e-5  # PyTorch nn.LayerNorm default

_ACT = {
    "relu": lambda x: jnp.maximum(x, 0.0),
    "tanh": jnp.tanh,
    "elu": lambda x: jnp.where(x > 0, x, jnp.exp(x) - 1.0),
    "identity": lambda x: x,
}


def _round_up(v, m):
    return (v + m - 1) // m * m


def _cdiv(a, b):
    return (a + b - 1) // b


def _vmem_cap_bytes():
    """Device-aware scoped-VMEM ceiling with ~25% headroom."""
    try:
        cap = int(pltpu.get_tpu_info().vmem_capacity_bytes)
    except Exception:
        cap = 64 << 20  # assume the smallest per-core VMEM (v7x)
    return max(3 * cap // 4, 16 << 20)


def _choose_tile(B, tile_b):
    """Batch tile: multiple of 8, <= tile_b, and >= 2 grid steps when B >= 16
    so v7x's two TensorCores both get work (harmless ~0.35us/step elsewhere)."""
    tb = min(tile_b, _round_up(B, 8))
    if B >= 16:
        tb = min(tb, _round_up(_cdiv(B, 2), 8))
    return max(8, _round_up(tb, 8))


def _layernorm(x, gamma, beta, n_valid, mask):
    """Biased-variance LayerNorm over the last dim.

    Padded lanes of `x` are zero by construction, so the plain sum is already the
    sum over valid lanes; `mask` (if any) keeps padded lanes out of the variance
    and zeroes them in the output.  rsqrt lands on the EUP slot.
    """
    inv_n = 1.0 / float(n_valid)
    mean = jnp.sum(x, axis=-1, keepdims=True) * inv_n
    xc = x - mean
    if mask is not None:
        xc = xc * mask
    var = jnp.sum(xc * xc, axis=-1, keepdims=True) * inv_n
    return xc * jax.lax.rsqrt(var + LN_EPS) * gamma + beta


def _resblock_kernel(*refs, ln, proj, act, n_out, out_p, compute_dtype):
    """Generic ResidualBlock body; ln / proj are static Python flags."""
    it = iter(refs)
    x_ref = next(it)
    w1_ref = next(it)   # (in_p, out_p) or fused (in_p, 2*out_p) if proj  (K, N)
    b1_ref = next(it)   # (1, out_p) or (1, 2*out_p)
    w2_ref = next(it)   # (out_p, out_p)  already transposed to (K, N)
    b2_ref = next(it)   # (1, out_p)
    if ln:
        g1_ref, be1_ref = next(it), next(it)
        g2_ref, be2_ref = next(it), next(it)
    o_ref = next(it)

    xc = x_ref[...].astype(compute_dtype)

    # fc1 (+ shortcut projection fused into the same MXU pass when proj=True).
    h = jnp.dot(xc, w1_ref[...], preferred_element_type=jnp.float32) + b1_ref[...]
    if proj:
        out = h[:, :out_p]
        # Park the projection shortcut in the output VMEM tile so it is not kept
        # live in vregs across the second matmul and the two LayerNorms.
        o_ref[...] = h[:, out_p:].astype(o_ref.dtype)
    else:
        out = h

    mask = None
    if ln and n_out != out_p:
        mask = (jax.lax.broadcasted_iota(jnp.int32, (1, out_p), 1)
                < n_out).astype(jnp.float32)

    if ln:
        out = _layernorm(out, g1_ref[...], be1_ref[...], n_out, mask)
    out = act(out)

    out = jnp.dot(out.astype(compute_dtype), w2_ref[...],
                  preferred_element_type=jnp.float32) + b2_ref[...]
    if ln:
        out = _layernorm(out, g2_ref[...], be2_ref[...], n_out, mask)

    if proj:
        residual = o_ref[...].astype(jnp.float32)
    else:
        residual = x_ref[...].astype(jnp.float32)   # re-read at the add (no live range)

    o_ref[...] = act(out + residual).astype(o_ref.dtype)


def prepare_params(params, *, ln, compute_dtype=jnp.bfloat16):
    """One-time parameter prep.

    Pads feature dims to 128-multiples, transposes the PyTorch (out, in) weights
    to (K, N) MXU-friendly layout, casts matmul weights to `compute_dtype`
    (default bf16), and fuses (fc1, shortcut) into a single weight when a
    projection exists.  All of this runs once — never per call.
    """
    out_dim, in_dim = params["w1"].shape
    proj = "ws" in params
    if not proj:
        assert in_dim == out_dim, "identity shortcut requires in_dim == out_dim"
    in_p = _round_up(in_dim, 128)
    out_p = _round_up(out_dim, 128)

    def pad_t(w, rows_p, cols_p):
        wt = w.T  # (out, in) -> (in, out); done once here, never in-kernel
        return jnp.pad(wt, ((0, rows_p - wt.shape[0]), (0, cols_p - wt.shape[1])))

    def padv(v, n):
        return jnp.pad(v, (0, n - v.shape[0])).reshape(1, n).astype(jnp.float32)

    w1 = pad_t(params["w1"], in_p, out_p)           # (in_p, out_p)
    b1 = padv(params["b1"], out_p)
    if proj:
        ws = pad_t(params["ws"], in_p, out_p)
        bs = padv(params["bs"], out_p)
        w1 = jnp.concatenate([w1, ws], axis=1)      # (in_p, 2*out_p)
        b1 = jnp.concatenate([b1, bs], axis=1)      # (1, 2*out_p)

    prepared = {
        "w1": w1.astype(compute_dtype),
        "b1": b1,
        "w2": pad_t(params["w2"], out_p, out_p).astype(compute_dtype),
        "b2": padv(params["b2"], out_p),
    }
    if ln:
        prepared["g1"] = padv(params["g1"], out_p)
        prepared["be1"] = padv(params["be1"], out_p)
        prepared["g2"] = padv(params["g2"], out_p)
        prepared["be2"] = padv(params["be2"], out_p)

    meta = dict(in_dim=in_dim, out_dim=out_dim, in_p=in_p, out_p=out_p,
                ln=ln, proj=proj, compute_dtype=compute_dtype)
    return prepared, meta


def residual_block(x, prepared, meta, *, activation="relu", tile_b=512,
                   out_dtype=None):
    """Batch-tiled Pallas forward of ResidualBlock.

    tile_b is worth sweeping (256-1024 on v5e/v6e, 256-512 on v7x).  If the
    surrounding model runs bf16 activations, pass bf16 x and out_dtype=bf16 to
    halve the dominant HBM streams.
    """
    B, in_dim = x.shape
    assert in_dim == meta["in_dim"]
    in_p, out_p, out_dim = meta["in_p"], meta["out_p"], meta["out_dim"]
    out_dtype = out_dtype or x.dtype

    # Feature pad only when in_dim isn't lane-aligned (zero lanes are required
    # for correct contraction / LN statistics).  No batch pad: ragged last block
    # is handled by Pallas (OOB rows ignored / write-masked).
    x_in = x if in_dim == in_p else jnp.pad(x, ((0, 0), (0, in_p - in_dim)))

    tb = _choose_tile(B, tile_b)
    grid = (_cdiv(B, tb),)

    args = [x_in, prepared["w1"], prepared["b1"], prepared["w2"], prepared["b2"]]
    if meta["ln"]:
        args += [prepared["g1"], prepared["be1"],
                 prepared["g2"], prepared["be2"]]

    in_specs = [pl.BlockSpec((tb, in_p), lambda i: (i, 0))]
    in_specs += [pl.BlockSpec(a.shape, lambda i: (0, 0)) for a in args[1:]]
    out_spec = pl.BlockSpec((tb, out_p), lambda i: (i, 0))

    kernel = functools.partial(
        _resblock_kernel,
        ln=meta["ln"], proj=meta["proj"], act=_ACT[activation],
        n_out=out_dim, out_p=out_p,
        compute_dtype=meta["compute_dtype"])

    # VMEM budget: 2x resident params (Pallas double-buffers every input),
    # double-buffered x/out tiles, slack; capped per device generation.
    param_bytes = sum(int(a.size) * a.dtype.itemsize for a in args[1:])
    tile_bytes = 2 * (tb * in_p * x_in.dtype.itemsize
                      + tb * out_p * jnp.dtype(out_dtype).itemsize)
    budget = 2 * param_bytes + tile_bytes + (8 << 20)
    vmem_limit = int(min(max(budget, 32 << 20), _vmem_cap_bytes()))

    out = pl.pallas_call(
        kernel,
        out_shape=jax.ShapeDtypeStruct((B, out_p), out_dtype),
        grid=grid,
        in_specs=in_specs,
        out_specs=out_spec,
        compiler_params=pltpu.CompilerParams(
            dimension_semantics=("parallel",),
            vmem_limit_bytes=vmem_limit),
    )(*args)
    return out if out_p == out_dim else out[:, :out_dim]


# ----------------------------------------------------------------------------
# Pure-JAX reference + synthetic parameters (for validation).
# ----------------------------------------------------------------------------
def _layernorm_ref(x, gamma, beta):
    mean = jnp.mean(x, axis=-1, keepdims=True)
    var = jnp.mean((x - mean) ** 2, axis=-1, keepdims=True)
    return (x - mean) * jax.lax.rsqrt(var + LN_EPS) * gamma + beta


def residual_block_ref(x, params, *, ln, activation="relu"):
    act = _ACT[activation]
    residual = x @ params["ws"].T + params["bs"] if "ws" in params else x
    out = x @ params["w1"].T + params["b1"]
    if ln:
        out = _layernorm_ref(out, params["g1"], params["be1"])
    out = act(out)
    out = out @ params["w2"].T + params["b2"]
    if ln:
        out = _layernorm_ref(out, params["g2"], params["be2"])
    return act(out + residual)


def make_params(key, in_dim, out_dim, *, ln):
    ks = jax.random.split(key, 8)

    def lin(kw, kb, fan_in, fan_out):
        bound = 1.0 / jnp.sqrt(fan_in)
        w = jax.random.uniform(kw, (fan_out, fan_in), jnp.float32, -bound, bound)
        b = jax.random.uniform(kb, (fan_out,), jnp.float32, -bound, bound)
        return w, b

    p = {}
    p["w1"], p["b1"] = lin(ks[0], ks[1], in_dim, out_dim)
    p["w2"], p["b2"] = lin(ks[2], ks[3], out_dim, out_dim)
    if in_dim != out_dim:
        p["ws"], p["bs"] = lin(ks[4], ks[5], in_dim, out_dim)
    if ln:
        p["g1"] = jnp.ones((out_dim,), jnp.float32)
        p["be1"] = jnp.zeros((out_dim,), jnp.float32)
        p["g2"] = jnp.ones((out_dim,), jnp.float32)
        p["be2"] = jnp.zeros((out_dim,), jnp.float32)
    return p


if __name__ == "__main__":
    key = jax.random.PRNGKey(0)
    k = jax.random.split(key, 6)

    # Case 1: in_dim != out_dim, ln=True (fused projection shortcut + both
    # LayerNorms), f32 matmuls for a tight check; B=16 -> 2-step batch grid.
    B1, in1, out1 = 16, 32, 64
    x1 = jax.random.normal(k[0], (B1, in1), jnp.float32)
    raw1 = make_params(k[1], in1, out1, ln=True)
    prep1, meta1 = prepare_params(raw1, ln=True, compute_dtype=jnp.float32)
    y1 = residual_block(x1, prep1, meta1)
    r1 = residual_block_ref(x1, raw1, ln=True)

    # Case 2: module defaults — in_dim == out_dim, ln=False (identity shortcut).
    B2, d2 = 8, 32
    x2 = jax.random.normal(k[2], (B2, d2), jnp.float32)
    raw2 = make_params(k[3], d2, d2, ln=False)
    prep2, meta2 = prepare_params(raw2, ln=False, compute_dtype=jnp.float32)
    y2 = residual_block(x2, prep2, meta2)
    r2 = residual_block_ref(x2, raw2, ln=False)

    # Case 3: same params as case 1 but default bf16 MXU operands.
    prep3, meta3 = prepare_params(raw1, ln=True)          # bf16 by default
    y3 = residual_block(x1, prep3, meta3)

    # Case 4: lane-aligned features (128), ragged batch (24 rows, 16-row tiles),
    # identity shortcut + LayerNorm, bf16 weights — no pads/slices in the wrapper.
    B4, d4 = 24, 128
    x4 = jax.random.normal(k[4], (B4, d4), jnp.float32)
    raw4 = make_params(k[5], d4, d4, ln=True)
    prep4, meta4 = prepare_params(raw4, ln=True)           # bf16 by default
    y4 = residual_block(x4, prep4, meta4)
    r4 = residual_block_ref(x4, raw4, ln=True)

    jax.block_until_ready((y1, y2, y3, y4))
    assert y1.shape == (B1, out1) and y2.shape == (B2, d2)
    assert y3.shape == (B1, out1) and y4.shape == (B4, d4)
    assert jnp.allclose(y1, r1, atol=1e-5, rtol=1e-5)
    assert jnp.allclose(y2, r2, atol=1e-5, rtol=1e-5)
    assert jnp.allclose(y3.astype(jnp.float32), r1, atol=5e-2, rtol=5e-2)
    assert jnp.allclose(y4.astype(jnp.float32), r4, atol=1e-1, rtol=1e-1)
    print("KERNEL_OK")
</pallas_src>

<mosaic_0001>
module attributes {stable_mosaic.version = 11 : i64} {
  func.func @_resblock_kernel(%arg0: i32, %arg1: memref<8x128xf32, #tpu.memory_space<vmem>>, %arg2: memref<128x256xf32, #tpu.memory_space<vmem>>, %arg3: memref<1x256xf32, #tpu.memory_space<vmem>>, %arg4: memref<128x128xf32, #tpu.memory_space<vmem>>, %arg5: memref<1x128xf32, #tpu.memory_space<vmem>>, %arg6: memref<1x128xf32, #tpu.memory_space<vmem>>, %arg7: memref<1x128xf32, #tpu.memory_space<vmem>>, %arg8: memref<1x128xf32, #tpu.memory_space<vmem>>, %arg9: memref<1x128xf32, #tpu.memory_space<vmem>>, %arg10: memref<8x128xf32, #tpu.memory_space<vmem>>) attributes {dimension_semantics = [#tpu.dimension_semantics<parallel>], iteration_bounds = array<i64: 2>, scalar_prefetch = 0 : i64, scratch_operands = 0 : i64, tpu.core_type = #tpu.core_type<tc>, window_params = [{transform_indices = @transform_0, window_bounds = array<i64: 8, 128>}, {pipeline_mode = #tpu.pipeline_mode<synchronous>, transform_indices = @transform_1, window_bounds = array<i64: 128, 256>}, {pipeline_mode = #tpu.pipeline_mode<synchronous>, transform_indices = @transform_2, window_bounds = array<i64: 1, 256>}, {pipeline_mode = #tpu.pipeline_mode<synchronous>, transform_indices = @transform_3, window_bounds = array<i64: 128, 128>}, {pipeline_mode = #tpu.pipeline_mode<synchronous>, transform_indices = @transform_4, window_bounds = array<i64: 1, 128>}, {pipeline_mode = #tpu.pipeline_mode<synchronous>, transform_indices = @transform_5, window_bounds = array<i64: 1, 128>}, {pipeline_mode = #tpu.pipeline_mode<synchronous>, transform_indices = @transform_6, window_bounds = array<i64: 1, 128>}, {pipeline_mode = #tpu.pipeline_mode<synchronous>, transform_indices = @transform_7, window_bounds = array<i64: 1, 128>}, {pipeline_mode = #tpu.pipeline_mode<synchronous>, transform_indices = @transform_8, window_bounds = array<i64: 1, 128>}, {transform_indices = @transform_9, window_bounds = array<i64: 8, 128>}]} {
    %c0 = arith.constant 0 : index
    %c0_0 = arith.constant 0 : index
    %0 = vector.load %arg1[%c0, %c0_0] : memref<8x128xf32, #tpu.memory_space<vmem>>, vector<8x128xf32>
    %c0_1 = arith.constant 0 : index
    %c0_2 = arith.constant 0 : index
    %1 = vector.load %arg2[%c0_1, %c0_2] : memref<128x256xf32, #tpu.memory_space<vmem>>, vector<128x256xf32>
    %cst = arith.constant dense<0.000000e+00> : vector<8x256xf32>
    %2 = tpu.matmul %0, %1, %cst {dimension_numbers = #tpu.dot_dimension_numbers<[1], [0], [0], [1], [0, 0, 1, 1], [], []>} : vector<8x128xf32>, vector<128x256xf32>, vector<8x256xf32> -> vector<8x256xf32>
    %c0_3 = arith.constant 0 : index
    %c0_4 = arith.constant 0 : index
    %3 = vector.load %arg3[%c0_3, %c0_4] : memref<1x256xf32, #tpu.memory_space<vmem>>, vector<1x256xf32>
    %4 = vector.broadcast %3 : vector<1x256xf32> to vector<8x256xf32>
    %5 = arith.addf %2, %4 : vector<8x256xf32>
    %6 = vector.extract_strided_slice %5 {offsets = [0, 0], sizes = [8, 128], strides = [1, 1]} : vector<8x256xf32> to vector<8x128xf32>
    %7 = vector.extract_strided_slice %5 {offsets = [0, 128], sizes = [8, 128], strides = [1, 1]} : vector<8x256xf32> to vector<8x128xf32>
    %c0_5 = arith.constant 0 : index
    %c0_6 = arith.constant 0 : index
    %8 = vector.load %arg10[%c0_5, %c0_6] : memref<8x128xf32, #tpu.memory_space<vmem>>, vector<8x128xf32>
    tpu.vector_store %arg10[%c0_5, %c0_6], %7 {strides = array<i32>} : memref<8x128xf32, #tpu.memory_space<vmem>>, vector<8x128xf32>,
    %9 = tpu.iota {dimensions = array<i32: 1>} : vector<1x128xi32>
    %c64_i32 = arith.constant 64 : i32
    %10 = vector.broadcast %c64_i32 : i32 to vector<1x128xi32>
    %11 = arith.cmpi slt, %9, %10 : vector<1x128xi32>
    %12 = arith.extui %11 : vector<1x128xi1> to vector<1x128xi32>
    %13 = arith.sitofp %12 : vector<1x128xi32> to vector<1x128xf32>
    %c0_7 = arith.constant 0 : index
    %c0_8 = arith.constant 0 : index
    %14 = vector.load %arg6[%c0_7, %c0_8] : memref<1x128xf32, #tpu.memory_space<vmem>>, vector<1x128xf32>
    %c0_9 = arith.constant 0 : index
    %c0_10 = arith.constant 0 : index
    %15 = vector.load %arg7[%c0_9, %c0_10] : memref<1x128xf32, #tpu.memory_space<vmem>>, vector<1x128xf32>
    %cst_11 = arith.constant dense<0.000000e+00> : vector<8xf32>
    %16 = vector.multi_reduction <add>, %6, %cst_11 [1] : vector<8x128xf32> to vector<8xf32>
    %17 = vector.shape_cast %16 : vector<8xf32> to vector<8x1xf32>
    %cst_12 = arith.constant 1.562500e-02 : f32
    %18 = vector.broadcast %cst_12 : f32 to vector<8x1xf32>
    %19 = arith.mulf %17, %18 : vector<8x1xf32>
    %20 = vector.broadcast %19 : vector<8x1xf32> to vector<8x128xf32>
    %21 = arith.subf %6, %20 : vector<8x128xf32>
    %22 = vector.broadcast %13 : vector<1x128xf32> to vector<8x128xf32>
    %23 = arith.mulf %21, %22 : vector<8x128xf32>
    %24 = arith.mulf %23, %23 : vector<8x128xf32>
    %cst_13 = arith.constant dense<0.000000e+00> : vector<8xf32>
    %25 = vector.multi_reduction <add>, %24, %cst_13 [1] : vector<8x128xf32> to vector<8xf32>
    %26 = vector.shape_cast %25 : vector<8xf32> to vector<8x1xf32>
    %cst_14 = arith.constant 1.562500e-02 : f32
    %27 = vector.broadcast %cst_14 : f32 to vector<8x1xf32>
    %28 = arith.mulf %26, %27 : vector<8x1xf32>
    %cst_15 = arith.constant 9.99999974E-6 : f32
    %29 = vector.broadcast %cst_15 : f32 to vector<8x1xf32>
    %30 = arith.addf %28, %29 : vector<8x1xf32>
    %31 = math.rsqrt %30 : vector<8x1xf32>
    %32 = vector.broadcast %31 : vector<8x1xf32> to vector<8x128xf32>
    %33 = arith.mulf %23, %32 : vector<8x128xf32>
    %34 = vector.broadcast %14 : vector<1x128xf32> to vector<8x128xf32>
    %35 = arith.mulf %33, %34 : vector<8x128xf32>
    %36 = vector.broadcast %15 : vector<1x128xf32> to vector<8x128xf32>
    %37 = arith.addf %35, %36 : vector<8x128xf32>
    %cst_16 = arith.constant 0.000000e+00 : f32
    %38 = vector.broadcast %cst_16 : f32 to vector<8x128xf32>
    %39 = arith.maximumf %37, %38 : vector<8x128xf32>
    %c0_17 = arith.constant 0 : index
    %c0_18 = arith.constant 0 : index
    %40 = vector.load %arg4[%c0_17, %c0_18] : memref<128x128xf32, #tpu.memory_space<vmem>>, vector<128x128xf32>
    %cst_19 = arith.constant dense<0.000000e+00> : vector<8x128xf32>
    %41 = tpu.matmul %39, %40, %cst_19 {dimension_numbers = #tpu.dot_dimension_numbers<[1], [0], [0], [1], [0, 0, 1, 1], [], []>} : vector<8x128xf32>, vector<128x128xf32>, vector<8x128xf32> -> vector<8x128xf32>
    %c0_20 = arith.constant 0 : index
    %c0_21 = arith.constant 0 : index
    %42 = vector.load %arg5[%c0_20, %c0_21] : memref<1x128xf32, #tpu.memory_space<vmem>>, vector<1x128xf32>
    %43 = vector.broadcast %42 : vector<1x128xf32> to vector<8x128xf32>
    %44 = arith.addf %41, %43 : vector<8x128xf32>
    %c0_22 = arith.constant 0 : index
    %c0_23 = arith.constant 0 : index
    %45 = vector.load %arg8[%c0_22, %c0_23] : memref<1x128xf32, #tpu.memory_space<vmem>>, vector<1x128xf32>
    %c0_24 = arith.constant 0 : index
    %c0_25 = arith.constant 0 : index
    %46 = vector.load %arg9[%c0_24, %c0_25] : memref<1x128xf32, #tpu.memory_space<vmem>>, vector<1x128xf32>
    %cst_26 = arith.constant dense<0.000000e+00> : vector<8xf32>
    %47 = vector.multi_reduction <add>, %44, %cst_26 [1] : vector<8x128xf32> to vector<8xf32>
    %48 = vector.shape_cast %47 : vector<8xf32> to vector<8x1xf32>
    %cst_27 = arith.constant 1.562500e-02 : f32
    %49 = vector.broadcast %cst_27 : f32 to vector<8x1xf32>
    %50 = arith.mulf %48, %49 : vector<8x1xf32>
    %51 = vector.broadcast %50 : vector<8x1xf32> to vector<8x128xf32>
    %52 = arith.subf %44, %51 : vector<8x128xf32>
    %53 = vector.broadcast %13 : vector<1x128xf32> to vector<8x128xf32>
    %54 = arith.mulf %52, %53 : vector<8x128xf32>
    %55 = arith.mulf %54, %54 : vector<8x128xf32>
    %cst_28 = arith.constant dense<0.000000e+00> : vector<8xf32>
    %56 = vector.multi_reduction <add>, %55, %cst_28 [1] : vector<8x128xf32> to vector<8xf32>
    %57 = vector.shape_cast %56 : vector<8xf32> to vector<8x1xf32>
    %cst_29 = arith.constant 1.562500e-02 : f32
    %58 = vector.broadcast %cst_29 : f32 to vector<8x1xf32>
    %59 = arith.mulf %57, %58 : vector<8x1xf32>
    %cst_30 = arith.constant 9.99999974E-6 : f32
    %60 = vector.broadcast %cst_30 : f32 to vector<8x1xf32>
    %61 = arith.addf %59, %60 : vector<8x1xf32>
    %62 = math.rsqrt %61 : vector<8x1xf32>
    %63 = vector.broadcast %62 : vector<8x1xf32> to vector<8x128xf32>
    %64 = arith.mulf %54, %63 : vector<8x128xf32>
    %65 = vector.broadcast %45 : vector<1x128xf32> to vector<8x128xf32>
    %66 = arith.mulf %64, %65 : vector<8x128xf32>
    %67 = vector.broadcast %46 : vector<1x128xf32> to vector<8x128xf32>
    %68 = arith.addf %66, %67 : vector<8x128xf32>
    %c0_31 = arith.constant 0 : index
    %c0_32 = arith.constant 0 : index
    %69 = vector.load %arg10[%c0_31, %c0_32] : memref<8x128xf32, #tpu.memory_space<vmem>>, vector<8x128xf32>
    %70 = arith.addf %68, %69 : vector<8x128xf32>
    %cst_33 = arith.constant 0.000000e+00 : f32
    %71 = vector.broadcast %cst_33 : f32 to vector<8x128xf32>
    %72 = arith.maximumf %70, %71 : vector<8x128xf32>
    %c0_34 = arith.constant 0 : index
    %c0_35 = arith.constant 0 : index
    %73 = vector.load %arg10[%c0_34, %c0_35] : memref<8x128xf32, #tpu.memory_space<vmem>>, vector<8x128xf32>
    tpu.vector_store %arg10[%c0_34, %c0_35], %72 {strides = array<i32>} : memref<8x128xf32, #tpu.memory_space<vmem>>, vector<8x128xf32>,
    return
  }
  func.func @transform_0(%arg0: i32) -> (i32, i32) {
    %c0_i32 = arith.constant 0 : i32
    %c0_i32_0 = arith.constant 0 : i32
    return %arg0, %c0_i32 : i32, i32
  }
  func.func @transform_1(%arg0: i32) -> (i32, i32) {
    %c0_i32 = arith.constant 0 : i32
    %c0_i32_0 = arith.constant 0 : i32
    %c0_i32_1 = arith.constant 0 : i32
    return %c0_i32, %c0_i32_0 : i32, i32
  }
  func.func @transform_2(%arg0: i32) -> (i32, i32) {
    %c0_i32 = arith.constant 0 : i32
    %c0_i32_0 = arith.constant 0 : i32
    %c0_i32_1 = arith.constant 0 : i32
    return %c0_i32, %c0_i32_0 : i32, i32
  }
  func.func @transform_3(%arg0: i32) -> (i32, i32) {
    %c0_i32 = arith.constant 0 : i32
    %c0_i32_0 = arith.constant 0 : i32
    %c0_i32_1 = arith.constant 0 : i32
    return %c0_i32, %c0_i32_0 : i32, i32
  }
  func.func @transform_4(%arg0: i32) -> (i32, i32) {
    %c0_i32 = arith.constant 0 : i32
    %c0_i32_0 = arith.constant 0 : i32
    %c0_i32_1 = arith.constant 0 : i32
    return %c0_i32, %c0_i32_0 : i32, i32
  }
  func.func @transform_5(%arg0: i32) -> (i32, i32) {
    %c0_i32 = arith.constant 0 : i32
    %c0_i32_0 = arith.constant 0 : i32
    %c0_i32_1 = arith.constant 0 : i32
    return %c0_i32, %c0_i32_0 : i32, i32
  }
  func.func @transform_6(%arg0: i32) -> (i32, i32) {
    %c0_i32 = arith.constant 0 : i32
    %c0_i32_0 = arith.constant 0 : i32
    %c0_i32_1 = arith.constant 0 : i32
    return %c0_i32, %c0_i32_0 : i32, i32
  }
  func.func @transform_7(%arg0: i32) -> (i32, i32) {
    %c0_i32 = arith.constant 0 : i32
    %c0_i32_0 = arith.constant 0 : i32
    %c0_i32_1 = arith.constant 0 : i32
    return %c0_i32, %c0_i32_0 : i32, i32
  }
  func.func @transform_8(%arg0: i32) -> (i32, i32) {
    %c0_i32 = arith.constant 0 : i32
    %c0_i32_0 = arith.constant 0 : i32
    %c0_i32_1 = arith.constant 0 : i32
    return %c0_i32, %c0_i32_0 : i32, i32
  }
  func.func @transform_9(%arg0: i32) -> (i32, i32) {
    %c0_i32 = arith.constant 0 : i32
    %c0_i32_0 = arith.constant 0 : i32
    return %arg0, %c0_i32 : i32, i32
  }
}

</mosaic_0001>

<llo_original>
// kernel: tpu_custom_call.1
$region0: #{tpu_custom_call.1}
  #allocation0 [shape = 'u32[]', space=smem, size = 0x4, offset = 0x4, fixed_abs, tag = 'smem constant byte address 0x4 - core index']
  #allocation1 [shape = 'u32[144,128]{1,0:T(1,128)}', space=vmem, size = 0x12000, scoped, tag = 'internal scratch']
  %s0 = inlined_call_operand.hbm [shape: f32[16,128], index: 0, kind: input, shape index: {}]
  %s1 = inlined_call_operand.hbm [shape: f32[128,256], index: 1, kind: input, shape index: {}]
  %s2 = inlined_call_operand.vmem [shape: f32[1,256], index: 2, kind: input, shape index: {}]
  %s3 = inlined_call_operand.hbm [shape: f32[128,128], index: 3, kind: input, shape index: {}]
  %s4 = inlined_call_operand.vmem [shape: f32[1,128], index: 4, kind: input, shape index: {}]
  %s5 = inlined_call_operand.vmem [shape: f32[1,128], index: 5, kind: input, shape index: {}]
  %s6 = inlined_call_operand.vmem [shape: f32[1,128], index: 6, kind: input, shape index: {}]
  %s7 = inlined_call_operand.vmem [shape: f32[1,128], index: 7, kind: input, shape index: {}]
  %s8 = inlined_call_operand.vmem [shape: f32[1,128], index: 8, kind: input, shape index: {}]
  %s9 = inlined_call_operand.hbm [shape: f32[16,128], index: 9, kind: output, shape index: {}]
  %s10 = sld [smem:[#allocation0]]
  $region81: #{tpu_custom_call.1} parent=0
    _
  %s12 = ssub.s32 1, %s10
  %s13 = scalar_select 0, %s12, %s10
  $region1: #{tpu_custom_call.1} parent=0
    #allocation2 [shape = 'u8[8192]{0}', space=vmem, size = 0x2000, scoped, tag = 'input window, operand 0']
    #allocation3 [shape = 's32[2]{0}', space=sflag, size = 0x8, scoped, tag = 'scoped memory for tpu_custom_call.1']
    #allocation4 [shape = 's32[2]{0}', space=sflag, size = 0x8, scoped, tag = 'scoped memory for tpu_custom_call.1']
    #allocation5 [shape = 'u8[131072]{0}', space=vmem, size = 0x20000, scoped, tag = 'input window, operand 1, single buffered']
    #allocation6 [shape = 's32[1]{0}', space=sflag, size = 0x4, scoped, tag = 'scoped memory for tpu_custom_call.1']
    #allocation7 [shape = 'u8[65536]{0}', space=vmem, size = 0x10000, scoped, tag = 'input window, operand 3, single buffered']
    #allocation8 [shape = 'u8[8192]{0}', space=vmem, size = 0x2000, scoped, tag = 'output window, operand 0']
    %14 = vsyncpa [#allocation3], 0
    %s15 = scalar_lea.sflag [#allocation3], 1
    %16 = vsyncpa %s15, 0
    %17 = vsyncpa [#allocation6], 0
    %18 = vsyncpa [#allocation4], 0
    %s19 = scalar_lea.sflag [#allocation4], 1
    %20 = vsyncpa %s19, 0
    loop: start=0, step=1, limit=4
    $region2: #{tpu_custom_call.1} parent=1 // loop_pre_header
      _
    $region3: #{tpu_custom_call.1} parent=1 // loop_header
      %s22 = sphi 0, %s26
      %p23 = scmp.ge.s32.totalorder %s22, 4
      %s32 = sphi 0, %s34
      %s35 = sphi 0, %s32
      %s36 = sphi 0, %s35
      %s52 = sphi 0, %s36
      %s56 = sphi 0, %s56
      %s58 = sphi 0, %s56
      %s59 = sphi 0, %s58
      %s73 = sphi 0, %s59
      %s77 = sphi 0, %s77
      %s79 = sphi 0, %s77
      %s80 = sphi 0, %s79
      %s94 = sphi 0, %s80
      %s98 = sphi 0, %s98
      %s100 = sphi 0, %s98
      %s101 = sphi 0, %s100
      %s115 = sphi 0, %s101
      %s119 = sphi 0, %s119
      %s121 = sphi 0, %s119
      %s122 = sphi 0, %s121
      %s136 = sphi 0, %s122
      %s140 = sphi 0, %s140
      %s142 = sphi 0, %s140
      %s143 = sphi 0, %s142
      %s157 = sphi 0, %s143
      %s161 = sphi 0, %s161
      %s163 = sphi 0, %s161
      %s164 = sphi 0, %s163
      %s178 = sphi 0, %s164
      %s182 = sphi 0, %s182
      %s184 = sphi 0, %s182
      %s185 = sphi 0, %s184
      %s199 = sphi 0, %s185
      %s203 = sphi 0, %s203
      %s205 = sphi 0, %s203
      %s206 = sphi 0, %s205
      %s220 = sphi 0, %s206
      %s226 = sphi 0, %s228
      %s229 = sphi 0, %s226
      %s230 = sphi 0, %s229
      %s246 = sphi 0, %s230
    $region4: #{tpu_custom_call.1} parent=1 // loop_header_branch
      %25 = sbr.rel (%p23) target = $region8
    $region5: #{tpu_custom_call.1} parent=1 // loop_body
      %s27 = ssub.s32 %s22, 1
      %s28 = ssub.s32 %s22, 2
      %s29 = sadd.s32 %s22, 1
      %s30 = ssub.s32 %s22, %s29
      %p31 = scmp.eq.s32.totalorder %s30, 0
      %s33 = sadd.s32 %s32, 1
      %s34 = scalar_select %p31, %s32, %s33
      %p37 = pneg %p31
      %p38 = scmp.eq.s32.totalorder %s22, 1
      %p39 = por %p37, %p38
      %p40 = scmp.ne.s32.totalorder %s32, %s35
      %p41 = scmp.eq.s32.totalorder %s22, 0
      %p42 = por %p40, %p41
      %p43 = scmp.ne.s32.totalorder %s32, %s35
      %p44 = scmp.eq.s32.totalorder %s27, 1
      %p45 = por %p43, %p44
      %p46 = scmp.ne.s32.totalorder %s35, %s36
      %p47 = scmp.eq.s32.totalorder %s27, 0
      %p48 = por %p46, %p47
      %p49 = scmp.ne.s32.totalorder %s35, %s36
      %p50 = scmp.eq.s32.totalorder %s28, 1
      %p51 = por %p49, %p50
      %p53 = scmp.ne.s32.totalorder %s36, %s52
      %p54 = scmp.eq.s32.totalorder %s28, 0
      %p55 = por %p53, %p54
      %s57 = sadd.s32 %s56, 1
      %p60 = scmp.eq.s32.totalorder %s22, 1
      %p61 = scmp.ne.s32.totalorder %s56, %s58
      %p62 = scmp.eq.s32.totalorder %s22, 0
      %p63 = por %p61, %p62
      %p64 = scmp.ne.s32.totalorder %s56, %s58
      %p65 = scmp.eq.s32.totalorder %s27, 1
      %p66 = por %p64, %p65
      %p67 = scmp.ne.s32.totalorder %s58, %s59
      %p68 = scmp.eq.s32.totalorder %s27, 0
      %p69 = por %p67, %p68
      %p70 = scmp.ne.s32.totalorder %s58, %s59
      %p71 = scmp.eq.s32.totalorder %s28, 1
      %p72 = por %p70, %p71
      %p74 = scmp.ne.s32.totalorder %s59, %s73
      %p75 = scmp.eq.s32.totalorder %s28, 0
      %p76 = por %p74, %p75
      %s78 = sadd.s32 %s77, 1
      %p81 = scmp.eq.s32.totalorder %s22, 1
      %p82 = scmp.ne.s32.totalorder %s77, %s79
      %p83 = scmp.eq.s32.totalorder %s22, 0
      %p84 = por %p82, %p83
      %p85 = scmp.ne.s32.totalorder %s77, %s79
      %p86 = scmp.eq.s32.totalorder %s27, 1
      %p87 = por %p85, %p86
      %p88 = scmp.ne.s32.totalorder %s79, %s80
      %p89 = scmp.eq.s32.totalorder %s27, 0
      %p90 = por %p88, %p89
      %p91 = scmp.ne.s32.totalorder %s79, %s80
      %p92 = scmp.eq.s32.totalorder %s28, 1
      %p93 = por %p91, %p92
      %p95 = scmp.ne.s32.totalorder %s80, %s94
      %p96 = scmp.eq.s32.totalorder %s28, 0
      %p97 = por %p95, %p96
      %s99 = sadd.s32 %s98, 1
      %p102 = scmp.eq.s32.totalorder %s22, 1
      %p103 = scmp.ne.s32.totalorder %s98, %s100
      %p104 = scmp.eq.s32.totalorder %s22, 0
      %p105 = por %p103, %p104
      %p106 = scmp.ne.s32.totalorder %s98, %s100
      %p107 = scmp.eq.s32.totalorder %s27, 1
      %p108 = por %p106, %p107
      %p109 = scmp.ne.s32.totalorder %s100, %s101
      %p110 = scmp.eq.s32.totalorder %s27, 0
      %p111 = por %p109, %p110
      %p112 = scmp.ne.s32.totalorder %s100, %s101
      %p113 = scmp.eq.s32.totalorder %s28, 1
      %p114 = por %p112, %p113
      %p116 = scmp.ne.s32.totalorder %s101, %s115
      %p117 = scmp.eq.s32.totalorder %s28, 0
      %p118 = por %p116, %p117
      %s120 = sadd.s32 %s119, 1
      %p123 = scmp.eq.s32.totalorder %s22, 1
      %p124 = scmp.ne.s32.totalorder %s119, %s121
      %p125 = scmp.eq.s32.totalorder %s22, 0
      %p126 = por %p124, %p125
      %p127 = scmp.ne.s32.totalorder %s119, %s121
      %p128 = scmp.eq.s32.totalorder %s27, 1
      %p129 = por %p127, %p128
      %p130 = scmp.ne.s32.totalorder %s121, %s122
      %p131 = scmp.eq.s32.totalorder %s27, 0
      %p132 = por %p130, %p131
      %p133 = scmp.ne.s32.totalorder %s121, %s122
      %p134 = scmp.eq.s32.totalorder %s28, 1
      %p135 = por %p133, %p134
      %p137 = scmp.ne.s32.totalorder %s122, %s136
      %p138 = scmp.eq.s32.totalorder %s28, 0
      %p139 = por %p137, %p138
      %s141 = sadd.s32 %s140, 1
      %p144 = scmp.eq.s32.totalorder %s22, 1
      %p145 = scmp.ne.s32.totalorder %s140, %s142
      %p146 = scmp.eq.s32.totalorder %s22, 0
      %p147 = por %p145, %p146
      %p148 = scmp.ne.s32.totalorder %s140, %s142
      %p149 = scmp.eq.s32.totalorder %s27, 1
      %p150 = por %p148, %p149
      %p151 = scmp.ne.s32.totalorder %s142, %s143
      %p152 = scmp.eq.s32.totalorder %s27, 0
      %p153 = por %p151, %p152
      %p154 = scmp.ne.s32.totalorder %s142, %s143
      %p155 = scmp.eq.s32.totalorder %s28, 1
      %p156 = por %p154, %p155
      %p158 = scmp.ne.s32.totalorder %s143, %s157
      %p159 = scmp.eq.s32.totalorder %s28, 0
      %p160 = por %p158, %p159
      %s162 = sadd.s32 %s161, 1
      %p165 = scmp.eq.s32.totalorder %s22, 1
      %p166 = scmp.ne.s32.totalorder %s161, %s163
      %p167 = scmp.eq.s32.totalorder %s22, 0
      %p168 = por %p166, %p167
      %p169 = scmp.ne.s32.totalorder %s161, %s163
      %p170 = scmp.eq.s32.totalorder %s27, 1
      %p171 = por %p169, %p170
      %p172 = scmp.ne.s32.totalorder %s163, %s164
      %p173 = scmp.eq.s32.totalorder %s27, 0
      %p174 = por %p172, %p173
      %p175 = scmp.ne.s32.totalorder %s163, %s164
      %p176 = scmp.eq.s32.totalorder %s28, 1
      %p177 = por %p175, %p176
      %p179 = scmp.ne.s32.totalorder %s164, %s178
      %p180 = scmp.eq.s32.totalorder %s28, 0
      %p181 = por %p179, %p180
      %s183 = sadd.s32 %s182, 1
      %p186 = scmp.eq.s32.totalorder %s22, 1
      %p187 = scmp.ne.s32.totalorder %s182, %s184
      %p188 = scmp.eq.s32.totalorder %s22, 0
      %p189 = por %p187, %p188
      %p190 = scmp.ne.s32.totalorder %s182, %s184
      %p191 = scmp.eq.s32.totalorder %s27, 1
      %p192 = por %p190, %p191
      %p193 = scmp.ne.s32.totalorder %s184, %s185
      %p194 = scmp.eq.s32.totalorder %s27, 0
      %p195 = por %p193, %p194
      %p196 = scmp.ne.s32.totalorder %s184, %s185
      %p197 = scmp.eq.s32.totalorder %s28, 1
      %p198 = por %p196, %p197
      %p200 = scmp.ne.s32.totalorder %s185, %s199
      %p201 = scmp.eq.s32.totalorder %s28, 0
      %p202 = por %p200, %p201
      %s204 = sadd.s32 %s203, 1
      %p207 = scmp.eq.s32.totalorder %s22, 1
      %p208 = scmp.ne.s32.totalorder %s203, %s205
      %p209 = scmp.eq.s32.totalorder %s22, 0
      %p210 = por %p208, %p209
      %p211 = scmp.ne.s32.totalorder %s203, %s205
      %p212 = scmp.eq.s32.totalorder %s27, 1
      %p213 = por %p211, %p212
      %p214 = scmp.ne.s32.totalorder %s205, %s206
      %p215 = scmp.eq.s32.totalorder %s27, 0
      %p216 = por %p214, %p215
      %p217 = scmp.ne.s32.totalorder %s205, %s206
      %p218 = scmp.eq.s32.totalorder %s28, 1
      %p219 = por %p217, %p218
      %p221 = scmp.ne.s32.totalorder %s206, %s220
      %p222 = scmp.eq.s32.totalorder %s28, 0
      %p223 = por %p221, %p222
      %s224 = ssub.s32 %s22, %s29
      %p225 = scmp.eq.s32.totalorder %s224, 0
      %s227 = sadd.s32 %s226, 1
      %s228 = scalar_select %p225, %s226, %s227
      %p231 = pneg %p225
      %p232 = scmp.eq.s32.totalorder %s22, 1
      %p233 = por %p231, %p232
      %p234 = scmp.ne.s32.totalorder %s226, %s229
      %p235 = scmp.eq.s32.totalorder %s22, 0
      %p236 = por %p234, %p235
      %p237 = scmp.ne.s32.totalorder %s226, %s229
      %p238 = scmp.eq.s32.totalorder %s27, 1
      %p239 = por %p237, %p238
      %p240 = scmp.ne.s32.totalorder %s229, %s230
      %p241 = scmp.eq.s32.totalorder %s27, 0
      %p242 = por %p240, %p241
      %p243 = scmp.ne.s32.totalorder %s229, %s230
      %p244 = scmp.eq.s32.totalorder %s28, 1
      %p245 = por %p243, %p244
      %p247 = scmp.ne.s32.totalorder %s230, %s246
      %p248 = scmp.eq.s32.totalorder %s28, 0
      %p249 = por %p247, %p248
      %p250 = scmp.le.s32.totalorder 1, %s22
      %p251 = scmp.lt.s32.totalorder %s22, 3
      %p252 = pnand %p250, %p251
      %p253 = pneg %p252
      // Predicated region
      $region9: #{tpu_custom_call.1} parent=5 // pred_check
        _
      $region10: #{tpu_custom_call.1} parent=5 // pred_check_branch
        %255 = sbr.rel (%p252) target = $region12
      $region11: #{tpu_custom_call.1} parent=5 // pred_region
        %s256 = ssub.s32 %s22, 1
        // Predicated region
        $region13: #{tpu_custom_call.1} parent=11 // pred_check
          %p257 = pneg %p69
        $region14: #{tpu_custom_call.1} parent=11 // pred_check_branch
          %259 = sbr.rel (%p257) target = $region16
        $region15: #{tpu_custom_call.1} parent=11 // pred_region
          %s261 = ssub.s32 4096, 4096
          %262 = vsyncadd [#allocation6], %s261
          %s263 = sshll.u32 [#allocation5], 4
          %s264 = int_to_ptr.vmem [resolvable:$true] %s263
          %269 = dma.hbm_to_vmem [thread:$0]  %s1, 4096, %s264, [#allocation6], 256, 256, 16
        $region16: #{tpu_custom_call.1} parent=11 // pred_fallthru
          _
        // Predicated region
        $region17: #{tpu_custom_call.1} parent=11 // pred_check
          %p270 = pneg %p90
        $region18: #{tpu_custom_call.1} parent=11 // pred_check_branch
          %272 = sbr.rel (%p270) target = $region20
        $region19: #{tpu_custom_call.1} parent=11 // pred_region
          _
        $region20: #{tpu_custom_call.1} parent=11 // pred_fallthru
          _
        // Predicated region
        $region21: #{tpu_custom_call.1} parent=11 // pred_check
          %p273 = pneg %p111
        $region22: #{tpu_custom_call.1} parent=11 // pred_check_branch
          %275 = sbr.rel (%p273) target = $region24
        $region23: #{tpu_custom_call.1} parent=11 // pred_region
          %s277 = ssub.s32 2048, 2048
          %278 = vsyncadd [#allocation6], %s277
          %s279 = sshll.u32 [#allocation7], 4
          %s280 = int_to_ptr.vmem [resolvable:$true] %s279
          %285 = dma.hbm_to_vmem [thread:$0]  %s3, 2048, %s280, [#allocation6], 128, 128, 8
        $region24: #{tpu_custom_call.1} parent=11 // pred_fallthru
          _
        // Predicated region
        $region25: #{tpu_custom_call.1} parent=11 // pred_check
          %p286 = pneg %p132
        $region26: #{tpu_custom_call.1} parent=11 // pred_check_branch
          %288 = sbr.rel (%p286) target = $region28
        $region27: #{tpu_custom_call.1} parent=11 // pred_region
          _
        $region28: #{tpu_custom_call.1} parent=11 // pred_fallthru
          _
        // Predicated region
        $region29: #{tpu_custom_call.1} parent=11 // pred_check
          %p289 = pneg %p153
        $region30: #{tpu_custom_call.1} parent=11 // pred_check_branch
          %291 = sbr.rel (%p289) target = $region32
        $region31: #{tpu_custom_call.1} parent=11 // pred_region
          _
        $region32: #{tpu_custom_call.1} parent=11 // pred_fallthru
          _
        // Predicated region
        $region33: #{tpu_custom_call.1} parent=11 // pred_check
          %p292 = pneg %p174
        $region34: #{tpu_custom_call.1} parent=11 // pred_check_branch
          %294 = sbr.rel (%p292) target = $region36
        $region35: #{tpu_custom_call.1} parent=11 // pred_region
          _
        $region36: #{tpu_custom_call.1} parent=11 // pred_fallthru
          _
        // Predicated region
        $region37: #{tpu_custom_call.1} parent=11 // pred_check
          %p295 = pneg %p195
        $region38: #{tpu_custom_call.1} parent=11 // pred_check_branch
          %297 = sbr.rel (%p295) target = $region40
        $region39: #{tpu_custom_call.1} parent=11 // pred_region
          _
        $region40: #{tpu_custom_call.1} parent=11 // pred_fallthru
          _
        // Predicated region
        $region41: #{tpu_custom_call.1} parent=11 // pred_check
          %p298 = pneg %p216
        $region42: #{tpu_custom_call.1} parent=11 // pred_check_branch
          %300 = sbr.rel (%p298) target = $region44
        $region43: #{tpu_custom_call.1} parent=11 // pred_region
          _
        $region44: #{tpu_custom_call.1} parent=11 // pred_fallthru
          _
      $region12: #{tpu_custom_call.1} parent=5 // pred_fallthru
        _
      %p301 = scmp.lt.s32.totalorder %s22, 2
      // Predicated region
      $region45: #{tpu_custom_call.1} parent=5 // pred_check
        %p302 = pneg %p301
      $region46: #{tpu_custom_call.1} parent=5 // pred_check_branch
        %304 = sbr.rel (%p302) target = $region48
      $region47: #{tpu_custom_call.1} parent=5 // pred_region
        // Predicated region
        $region49: #{tpu_custom_call.1} parent=47 // pred_check
          %p305 = pneg %p42
        $region50: #{tpu_custom_call.1} parent=47 // pred_check_branch
          %307 = sbr.rel (%p305) target = $region52
        $region51: #{tpu_custom_call.1} parent=47 // pred_region
          %s308 = sand.u32 %s32, 1
          %s309 = scalar_lea.sflag [#allocation3], %s308
          %s310 = sand.u32 %s32, 1
          %s311 = smul.addr %s310, 8
          %s312 = scalar_lea.vmem [#allocation2], %s311
          %s314 = ssub.s32 128, 128
          %315 = vsyncadd %s309, %s314
          %s316 = smul.addr %s22, 128
          %s317 = scalar_lea.hbm %s0, %s316
          %s319 = sshll.u32 %s312, 4
          %s320 = int_to_ptr.vmem [resolvable:$true] %s319
          %322 = dma.hbm_to_vmem [thread:$0]  %s317, 128, %s320, %s309
        $region52: #{tpu_custom_call.1} parent=47 // pred_fallthru
          _
      $region48: #{tpu_custom_call.1} parent=5 // pred_fallthru
        _
      %p323 = scmp.le.s32.totalorder 1, %s22
      %p324 = scmp.lt.s32.totalorder %s22, 3
      %p325 = pnand %p323, %p324
      %p326 = pneg %p325
      // Predicated region
      $region53: #{tpu_custom_call.1} parent=5 // pred_check
        _
      $region54: #{tpu_custom_call.1} parent=5 // pred_check_branch
        %328 = sbr.rel (%p325) target = $region56
      $region55: #{tpu_custom_call.1} parent=5 // pred_region
        %s329 = ssub.s32 %s22, 1
        %s330 = sand.u32 %s35, 1
        %s331 = scalar_lea.sflag [#allocation3], %s330
        %s332 = sand.u32 %s35, 1
        %s333 = smul.addr %s332, 8
        %s334 = scalar_lea.vmem [#allocation2], %s333
        // Predicated region
        $region57: #{tpu_custom_call.1} parent=55 // pred_check
          %p335 = pneg %p48
        $region58: #{tpu_custom_call.1} parent=55 // pred_check_branch
          %337 = sbr.rel (%p335) target = $region60
        $region59: #{tpu_custom_call.1} parent=55 // pred_region
          %338 = dma.done %s331, 128
        $region60: #{tpu_custom_call.1} parent=55 // pred_fallthru
          _
        // Predicated region
        $region61: #{tpu_custom_call.1} parent=55 // pred_check
          %p339 = pneg %p69
        $region62: #{tpu_custom_call.1} parent=55 // pred_check_branch
          %341 = sbr.rel (%p339) target = $region64
        $region63: #{tpu_custom_call.1} parent=55 // pred_region
          %342 = dma.done [#allocation6], 4096
        $region64: #{tpu_custom_call.1} parent=55 // pred_fallthru
          _
        // Predicated region
        $region65: #{tpu_custom_call.1} parent=55 // pred_check
          %p343 = pneg %p111
        $region66: #{tpu_custom_call.1} parent=55 // pred_check_branch
          %345 = sbr.rel (%p343) target = $region68
        $region67: #{tpu_custom_call.1} parent=55 // pred_region
          %346 = dma.done [#allocation6], 2048
        $region68: #{tpu_custom_call.1} parent=55 // pred_fallthru
          _
        %s347 = sand.u32 %s35, 1
        %s348 = scalar_lea.sflag [#allocation3], %s347
        %s349 = sand.u32 %s35, 1
        %s350 = smul.addr %s349, 8
        %s351 = scalar_lea.vmem [#allocation2], %s350
        %p352 = pneg %p48
        %p353 = pneg %p45
        %p354 = pneg %p69
        %p355 = pneg %p66
        %p356 = pneg %p90
        %p357 = pneg %p87
        %p358 = pneg %p111
        %p359 = pneg %p108
        %p360 = pneg %p132
        %p361 = pneg %p129
        %p362 = pneg %p153
        %p363 = pneg %p150
        %p364 = pneg %p174
        %p365 = pneg %p171
        %p366 = pneg %p195
        %p367 = pneg %p192
        %p368 = pneg %p216
        %p369 = pneg %p213
        %p370 = pneg %p242
        %p371 = pneg %p239
        %s372 = sand.u32 %s229, 1
        %s373 = scalar_lea.sflag [#allocation4], %s372
        %s374 = sand.u32 %s229, 1
        %s375 = smul.addr %s374, 8
        %s376 = scalar_lea.vmem [#allocation8], %s375
        %v377 = vld [vmem:[%s334] sm:$0xff]
        %v378 = vld [vmem:[#allocation5] sm:$0xff]
        %v379 = vld [vmem:[#allocation5 + $0x8] sm:$0xff]
        %v380 = vld [vmem:[#allocation5 + $0x10] sm:$0xff]
        %v381 = vld [vmem:[#allocation5 + $0x18] sm:$0xff]
        %v382 = vld [vmem:[#allocation5 + $0x20] sm:$0xff]
        %v383 = vld [vmem:[#allocation5 + $0x28] sm:$0xff]
        %v384 = vld [vmem:[#allocation5 + $0x30] sm:$0xff]
        %v385 = vld [vmem:[#allocation5 + $0x38] sm:$0xff]
        %v386 = vld [vmem:[#allocation5 + $0x40] sm:$0xff]
        %v387 = vld [vmem:[#allocation5 + $0x48] sm:$0xff]
        %v388 = vld [vmem:[#allocation5 + $0x50] sm:$0xff]
        %v389 = vld [vmem:[#allocation5 + $0x58] sm:$0xff]
        %v390 = vld [vmem:[#allocation5 + $0x60] sm:$0xff]
        %v391 = vld [vmem:[#allocation5 + $0x68] sm:$0xff]
        %v392 = vld [vmem:[#allocation5 + $0x70] sm:$0xff]
        %v393 = vld [vmem:[#allocation5 + $0x78] sm:$0xff]
        %v394 = vld [vmem:[#allocation5 + $0x80] sm:$0xff]
        %v395 = vld [vmem:[#allocation5 + $0x88] sm:$0xff]
        %v396 = vld [vmem:[#allocation5 + $0x90] sm:$0xff]
        %v397 = vld [vmem:[#allocation5 + $0x98] sm:$0xff]
        %v398 = vld [vmem:[#allocation5 + $0xa0] sm:$0xff]
        %v399 = vld [vmem:[#allocation5 + $0xa8] sm:$0xff]
        %v400 = vld [vmem:[#allocation5 + $0xb0] sm:$0xff]
        %v401 = vld [vmem:[#allocation5 + $0xb8] sm:$0xff]
        %v402 = vld [vmem:[#allocation5 + $0xc0] sm:$0xff]
        %v403 = vld [vmem:[#allocation5 + $0xc8] sm:$0xff]
        %v404 = vld [vmem:[#allocation5 + $0xd0] sm:$0xff]
        %v405 = vld [vmem:[#allocation5 + $0xd8] sm:$0xff]
        %v406 = vld [vmem:[#allocation5 + $0xe0] sm:$0xff]
        %v407 = vld [vmem:[#allocation5 + $0xe8] sm:$0xff]
        %v408 = vld [vmem:[#allocation5 + $0xf0] sm:$0xff]
        %v409 = vld [vmem:[#allocation5 + $0xf8] sm:$0xff]
        %v410 = vld [vmem:[%s2] sm:$0x3]
        %v412 = vlaneseq
        %v413 = vshrl.u32 %v412, 7
        %v414 = vsub.s32 0, %v413
        %v415 = vrot.slane %v410, %v414
        %v416 = vlaneseq
        %v417 = vshrl.u32 %v416, 7
        %v418 = vsub.s32 1, %v417
        %v419 = vrot.slane %v410, %v418
        %422 = vmatprep.subr.mxu0 %v379
        %423 = vmatpush1.msra.mxu0 %v378
        %424 = vmatprep.subr.mxu0 %v381
        %425 = vmatpush1.msra.mxu0 %v380
        %426 = vmatprep.subr.mxu0 %v383
        %427 = vmatpush1.msra.mxu0 %v382
        %428 = vmatprep.subr.mxu0 %v385
        %429 = vmatpush1.msra.mxu0 %v384
        %430 = vmatprep.subr.mxu0 %v387
        %431 = vmatpush1.msra.mxu0 %v386
        %432 = vmatprep.subr.mxu0 %v389
        %433 = vmatpush1.msra.mxu0 %v388
        %434 = vmatprep.subr.mxu0 %v391
        %435 = vmatpush1.msra.mxu0 %v390
        %436 = vmatprep.subr.mxu0 %v393
        %437 = vmatpush1.msra.mxu0 %v392
        %438 = vmatprep.subr.mxu0 %v395
        %439 = vmatpush1.msra.mxu0 %v394
        %440 = vmatprep.subr.mxu0 %v397
        %441 = vmatpush1.msra.mxu0 %v396
        %442 = vmatprep.subr.mxu0 %v399
        %443 = vmatpush1.msra.mxu0 %v398
        %444 = vmatprep.subr.mxu0 %v401
        %445 = vmatpush1.msra.mxu0 %v400
        %446 = vmatprep.subr.mxu0 %v403
        %447 = vmatpush1.msra.mxu0 %v402
        %448 = vmatprep.subr.mxu0 %v405
        %449 = vmatpush1.msra.mxu0 %v404
        %450 = vmatprep.subr.mxu0 %v407
        %451 = vmatpush1.msra.mxu0 %v406
        %452 = vmatprep.subr.mxu0 %v409
        %453 = vmatpush1.msra.mxu0 %v408
        %454 = vmatprep.subr.mxu0 0.0
        %455 = vmatpush1.msra.mxu0 0.0
        %456 = vmatprep.subr.mxu0 0.0
        %457 = vmatpush1.msra.mxu0 0.0
        %458 = vmatprep.subr.mxu0 0.0
        %459 = vmatpush1.msra.mxu0 0.0
        %460 = vmatprep.subr.mxu0 0.0
        %461 = vmatpush1.msra.mxu0 0.0
        %462 = vmatprep.subr.mxu0 0.0
        %463 = vmatpush1.msra.mxu0 0.0
        %464 = vmatprep.subr.mxu0 0.0
        %465 = vmatpush1.msra.mxu0 0.0
        %466 = vmatprep.subr.mxu0 0.0
        %467 = vmatpush1.msra.mxu0 0.0
        %468 = vmatprep.subr.mxu0 0.0
        %469 = vmatpush1.msra.mxu0 0.0
        %470 = vmatprep.subr.mxu0 0.0
        %471 = vmatpush1.msra.mxu0 0.0
        %472 = vmatprep.subr.mxu0 0.0
        %473 = vmatpush1.msra.mxu0 0.0
        %474 = vmatprep.subr.mxu0 0.0
        %475 = vmatpush1.msra.mxu0 0.0
        %476 = vmatprep.subr.mxu0 0.0
        %477 = vmatpush1.msra.mxu0 0.0
        %478 = vmatprep.subr.mxu0 0.0
        %479 = vmatpush1.msra.mxu0 0.0
        %480 = vmatprep.subr.mxu0 0.0
        %481 = vmatpush1.msra.mxu0 0.0
        %482 = vmatprep.subr.mxu0 0.0
        %483 = vmatpush1.msra.mxu0 0.0
        %484 = vmatprep.subr.mxu0 0.0
        %485 = vmatpush1.msra.mxu0 0.0
        %486 = vmatprep.mubr.f32.mxu0 0.0
        %487 = vmatmul.mubr.f32.gmra.mrb[0].mxu0 %v377
        %v488 = vpop.f32.mrb[0].mxu0
        %v489 = vadd.f32 %v415, %v488
        %v490 = vpop.f32.mrb[0].mxu0
        %v491 = vadd.f32 %v419, %v490
        %492 = vdwg.mxu0
        %493 = vst [vmem:[%s376] sm:$0xff] %v491
        %v494 = vlaneseq
        %v495 = vand.u32 %v494, 127
        %vm496 = vcmp.lt.s32.totalorder %v495, 64
        %v497 = vsel %vm496, 1, 0
        %v498 = vcvt.s32.f32 %v497
        %v499 = vld [vmem:[%s5] sm:$0x1]
        %v500 = vld [vmem:[%s6] sm:$0x1]
        %501 = vadd.xlane.f32.xlu0 %v489
        %v502 = vpop.xlane.xlu0 %501
        %v503 = vmul.f32 %v502, 0.015625
        %v504 = vsub.f32 %v489, %v503
        %v505 = vmul.f32 %v504, %v498
        %v506 = vmul.f32 %v505, %v505
        %507 = vadd.xlane.f32.xlu0 %v506
        %v508 = vpop.xlane.xlu0 %507
        %v509 = vmul.f32 %v508, 0.015625
        %v510 = vadd.f32 %v509, 1e-05
        %v511 = vrsqrt.pop %v510
        %v512 = vmul.f32 %v505, %v511
        %v514 = vlaneseq
        %v515 = vshrl.u32 %v514, 7
        %v516 = vsub.s32 0, %v515
        %v517 = vrot.slane %v499, %v516
        %v519 = vmul.f32 %v512, %v517
        %v521 = vlaneseq
        %v522 = vshrl.u32 %v521, 7
        %v523 = vsub.s32 0, %v522
        %v524 = vrot.slane %v500, %v523
        %v526 = vadd.f32 %v519, %v524
        %v527 = vmax.f32 %v526, 0.0
        %v528 = vld [vmem:[#allocation7] sm:$0xff]
        %v529 = vld [vmem:[#allocation7 + $0x8] sm:$0xff]
        %v530 = vld [vmem:[#allocation7 + $0x10] sm:$0xff]
        %v531 = vld [vmem:[#allocation7 + $0x18] sm:$0xff]
        %v532 = vld [vmem:[#allocation7 + $0x20] sm:$0xff]
        %v533 = vld [vmem:[#allocation7 + $0x28] sm:$0xff]
        %v534 = vld [vmem:[#allocation7 + $0x30] sm:$0xff]
        %v535 = vld [vmem:[#allocation7 + $0x38] sm:$0xff]
        %v536 = vld [vmem:[#allocation7 + $0x40] sm:$0xff]
        %v537 = vld [vmem:[#allocation7 + $0x48] sm:$0xff]
        %v538 = vld [vmem:[#allocation7 + $0x50] sm:$0xff]
        %v539 = vld [vmem:[#allocation7 + $0x58] sm:$0xff]
        %v540 = vld [vmem:[#allocation7 + $0x60] sm:$0xff]
        %v541 = vld [vmem:[#allocation7 + $0x68] sm:$0xff]
        %v542 = vld [vmem:[#allocation7 + $0x70] sm:$0xff]
        %v543 = vld [vmem:[#allocation7 + $0x78] sm:$0xff]
        %v544 = vld [vmem:[%s4] sm:$0x1]
        %v546 = vlaneseq
        %v547 = vshrl.u32 %v546, 7
        %v548 = vsub.s32 0, %v547
        %v549 = vrot.slane %v544, %v548
        %551 = vmatprep.subr.mxu0 0.0
        %552 = vmatpush1.msra.mxu0 %v528
        %553 = vmatprep.subr.mxu0 0.0
        %554 = vmatpush1.msra.mxu0 %v529
        %555 = vmatprep.subr.mxu0 0.0
        %556 = vmatpush1.msra.mxu0 %v530
        %557 = vmatprep.subr.mxu0 0.0
        %558 = vmatpush1.msra.mxu0 %v531
        %559 = vmatprep.subr.mxu0 0.0
        %560 = vmatpush1.msra.mxu0 %v532
        %561 = vmatprep.subr.mxu0 0.0
        %562 = vmatpush1.msra.mxu0 %v533
        %563 = vmatprep.subr.mxu0 0.0
        %564 = vmatpush1.msra.mxu0 %v534
        %565 = vmatprep.subr.mxu0 0.0
        %566 = vmatpush1.msra.mxu0 %v535
        %567 = vmatprep.subr.mxu0 0.0
        %568 = vmatpush1.msra.mxu0 %v536
        %569 = vmatprep.subr.mxu0 0.0
        %570 = vmatpush1.msra.mxu0 %v537
        %571 = vmatprep.subr.mxu0 0.0
        %572 = vmatpush1.msra.mxu0 %v538
        %573 = vmatprep.subr.mxu0 0.0
        %574 = vmatpush1.msra.mxu0 %v539
        %575 = vmatprep.subr.mxu0 0.0
        %576 = vmatpush1.msra.mxu0 %v540
        %577 = vmatprep.subr.mxu0 0.0
        %578 = vmatpush1.msra.mxu0 %v541
        %579 = vmatprep.subr.mxu0 0.0
        %580 = vmatpush1.msra.mxu0 %v542
        %581 = vmatprep.subr.mxu0 0.0
        %582 = vmatpush1.msra.mxu0 %v543
        %583 = vmatprep.subr.mxu0 0.0
        %584 = vmatpush1.msra.mxu0 0.0
        %585 = vmatprep.subr.mxu0 0.0
        %586 = vmatpush1.msra.mxu0 0.0
        %587 = vmatprep.subr.mxu0 0.0
        %588 = vmatpush1.msra.mxu0 0.0
        %589 = vmatprep.subr.mxu0 0.0
        %590 = vmatpush1.msra.mxu0 0.0
        %591 = vmatprep.subr.mxu0 0.0
        %592 = vmatpush1.msra.mxu0 0.0
        %593 = vmatprep.subr.mxu0 0.0
        %594 = vmatpush1.msra.mxu0 0.0
        %595 = vmatprep.subr.mxu0 0.0
        %596 = vmatpush1.msra.mxu0 0.0
        %597 = vmatprep.subr.mxu0 0.0
        %598 = vmatpush1.msra.mxu0 0.0
        %599 = vmatprep.subr.mxu0 0.0
        %600 = vmatpush1.msra.mxu0 0.0
        %601 = vmatprep.subr.mxu0 0.0
        %602 = vmatpush1.msra.mxu0 0.0
        %603 = vmatprep.subr.mxu0 0.0
        %604 = vmatpush1.msra.mxu0 0.0
        %605 = vmatprep.subr.mxu0 0.0
        %606 = vmatpush1.msra.mxu0 0.0
        %607 = vmatprep.subr.mxu0 0.0
        %608 = vmatpush1.msra.mxu0 0.0
        %609 = vmatprep.subr.mxu0 0.0
        %610 = vmatpush1.msra.mxu0 0.0
        %611 = vmatprep.subr.mxu0 0.0
        %612 = vmatpush1.msra.mxu0 0.0
        %613 = vmatprep.subr.mxu0 0.0
        %614 = vmatpush1.msra.mxu0 0.0
        %615 = vmatprep.mubr.f32.mxu0 0.0
        %616 = vmatmul.mubr.f32.gmra.mrb[0].mxu0 %v527
        %v617 = vpop.f32.mrb[0].mxu0
        %v618 = vadd.f32 %v549, %v617
        %v619 = vpop.f32.mrb[0].mxu0
        %620 = vdwg.mxu0
        %v621 = vld [vmem:[%s7] sm:$0x1]
        %v622 = vld [vmem:[%s8] sm:$0x1]
        %623 = vadd.xlane.f32.xlu0 %v618
        %v624 = vpop.xlane.xlu0 %623
        %v625 = vmul.f32 %v624, 0.015625
        %v626 = vsub.f32 %v618, %v625
        %v627 = vmul.f32 %v626, %v498
        %v628 = vmul.f32 %v627, %v627
        %629 = vadd.xlane.f32.xlu0 %v628
        %v630 = vpop.xlane.xlu0 %629
        %v631 = vmul.f32 %v630, 0.015625
        %v632 = vadd.f32 %v631, 1e-05
        %v633 = vrsqrt.pop %v632
        %v634 = vmul.f32 %v627, %v633
        %v636 = vlaneseq
        %v637 = vshrl.u32 %v636, 7
        %v638 = vsub.s32 0, %v637
        %v639 = vrot.slane %v621, %v638
        %v641 = vmul.f32 %v634, %v639
        %v643 = vlaneseq
        %v644 = vshrl.u32 %v643, 7
        %v645 = vsub.s32 0, %v644
        %v646 = vrot.slane %v622, %v645
        %v648 = vadd.f32 %v641, %v646
        %v649 = vld [vmem:[%s376] sm:$0xff]
        %v650 = vadd.f32 %v648, %v649
        %v651 = vmax.f32 %v650, 0.0
        %652 = vst [vmem:[%s376] sm:$0xff] %v651
        %s653 = sand.u32 %s229, 1
        %s654 = scalar_lea.sflag [#allocation4], %s653
        %s655 = sand.u32 %s229, 1
        %s656 = smul.addr %s655, 8
        %s657 = scalar_lea.vmem [#allocation8], %s656
        // Predicated region
        $region69: #{tpu_custom_call.1} parent=55 // pred_check
          %p658 = pneg %p239
        $region70: #{tpu_custom_call.1} parent=55 // pred_check_branch
          %660 = sbr.rel (%p658) target = $region72
        $region71: #{tpu_custom_call.1} parent=55 // pred_region
          %s662 = ssub.s32 128, 128
          %663 = vsyncadd %s654, %s662
          %s664 = smul.addr %s27, 128
          %s665 = scalar_lea.hbm %s9, %s664
          %s667 = sshll.u32 %s657, 4
          %s668 = int_to_ptr.vmem [resolvable:$true] %s667
          %670 = dma.vmem_to_hbm [thread:$0]  %s668, 128, %s665, %s654
        $region72: #{tpu_custom_call.1} parent=55 // pred_fallthru
          _
      $region56: #{tpu_custom_call.1} parent=5 // pred_fallthru
        _
      %p671 = scmp.le.s32.totalorder 2, %s22
      // Predicated region
      $region73: #{tpu_custom_call.1} parent=5 // pred_check
        %p672 = pneg %p671
      $region74: #{tpu_custom_call.1} parent=5 // pred_check_branch
        %674 = sbr.rel (%p672) target = $region76
      $region75: #{tpu_custom_call.1} parent=5 // pred_region
        %s675 = ssub.s32 %s22, 2
        // Predicated region
        $region77: #{tpu_custom_call.1} parent=75 // pred_check
          %p676 = pneg %p245
        $region78: #{tpu_custom_call.1} parent=75 // pred_check_branch
          %678 = sbr.rel (%p676) target = $region80
        $region79: #{tpu_custom_call.1} parent=75 // pred_region
          %s679 = sand.u32 %s230, 1
          %s680 = scalar_lea.sflag [#allocation4], %s679
          %s681 = sand.u32 %s230, 1
          %s682 = smul.addr %s681, 8
          %s683 = scalar_lea.vmem [#allocation8], %s682
          %684 = dma.done %s680, 128
        $region80: #{tpu_custom_call.1} parent=75 // pred_fallthru
          _
      $region76: #{tpu_custom_call.1} parent=5 // pred_fallthru
        _
    $region6: #{tpu_custom_call.1} parent=1 // loop_footer
      %s26 = sadd.s32 1, %s22
    $region7: #{tpu_custom_call.1} parent=1 // loop_footer_branch
      %21 = sbr.rel target = $region3
    $region8: #{tpu_custom_call.1} parent=1 // loop_exit
      _
    %685 = vsyncpa [#allocation3], 1
    %s686 = scalar_lea.sflag [#allocation3], 1
    %687 = vsyncpa %s686, 1
    %688 = vsyncpa [#allocation6], 1
    %689 = vsyncpa [#allocation4], 1
    %s690 = scalar_lea.sflag [#allocation4], 1
    %691 = vsyncpa %s690, 1

</llo_original>
